<compile_context>
chip_gen: v5e
topology: v5e:2x2
jax: 0.10.0
libtpu: 0.0.40
codegen_flags: <defaults>
</compile_context>

<pallas_src>
import functools

import jax
import jax.numpy as jnp
from jax.experimental import pallas as pl
from jax.experimental.pallas import tpu as pltpu


def _round_up(x: int, m: int) -> int:
    return (x + m - 1) // m * m


# ----------------------------- Pallas kernel --------------------------------
def fused_predictor_kernel(pooled_ref, wproj_ref, w1_ref, b1_ref, w2r_ref,
                           b2_ref, out_ref):
    """Fused projection + predictor MLP for one row-tile of graphs.

    pooled: [tm, F]   bf16   (per-graph pooled node features, row tile)
    wproj:  [F, Dp]   bf16   (resident; stand-in encoder projection)
    w1:     [Dp, Hp]  bf16   (resident; Linear(dim, 2*dim), lane-padded)
    b1:     [1, Hp]   f32    (resident; zero-padded)
    w2r:    [1, Hp]   f32    (resident; Linear(2*dim, 1) weight, transposed row)
    b2:     [1, 1]    f32    (SMEM scalar)
    out:    [tm, 128] f32    (lane-dense; logit broadcast across lanes)
    """
    # combined_model stand-in projection: [tm, F] @ [F, Dp] -> f32 accumulator.
    feats = jnp.dot(pooled_ref[...], wproj_ref[...],
                    preferred_element_type=jnp.float32)

    # Linear(dim, 2*dim): bf16 x bf16 on MXU, f32 accumulate; bias+ReLU in f32.
    h = jnp.dot(feats.astype(jnp.bfloat16), w1_ref[...],
                preferred_element_type=jnp.float32)
    h = jnp.maximum(h + b1_ref[...], 0.0)
    # Dropout(p=0.1) -> identity in eval mode.

    # Linear(2*dim, 1): VPU multiply + cross-lane reduce (avoids N=1 MXU matmul),
    # then broadcast across 128 lanes for an unmasked, lane-dense store.
    o = jnp.sum(h * w2r_ref[...], axis=-1, keepdims=True) + b2_ref[0, 0]
    out_ref[...] = jnp.broadcast_to(o, out_ref.shape).astype(out_ref.dtype)


# --------------------------- parameter preparation --------------------------
def init_params(key, node_feat_dim, dim):
    # Deterministic init mimicking torch.nn.Linear default (uniform +-1/sqrt(fan_in)).
    k0, k1, k2, k3, k4, k5 = jax.random.split(key, 6)

    def lin(kw, kb, fan_in, fan_out):
        bound = 1.0 / jnp.sqrt(jnp.float32(fan_in))
        w = jax.random.uniform(kw, (fan_in, fan_out), jnp.float32, -bound, bound)
        b = jax.random.uniform(kb, (1, fan_out), jnp.float32, -bound, bound)
        return w, b

    w_proj, _ = lin(k0, k1, node_feat_dim, dim)   # stand-in encoder projection
    w1, b1 = lin(k2, k3, dim, 2 * dim)            # Linear(dim, dim*2)
    w2, b2 = lin(k4, k5, 2 * dim, 1)              # Linear(dim*2, 1)
    return {"w_proj": w_proj, "w1": w1, "b1": b1, "w2": w2, "b2": b2}


def prepare_kernel_params(params):
    """One-time cast to bf16 + zero-pad feature dims to multiples of 128.

    Zero padding of weights/biases is numerically exact (padded lanes contribute
    zero through ReLU and the final reduction).
    """
    w_proj, w1, b1, w2, b2 = (params["w_proj"], params["w1"], params["b1"],
                              params["w2"], params["b2"])
    F, D = w_proj.shape
    H = w1.shape[1]
    Dp = _round_up(D, 128)
    Hp = _round_up(H, 128)

    wproj_p = jnp.zeros((F, Dp), jnp.bfloat16).at[:, :D].set(
        w_proj.astype(jnp.bfloat16))
    w1_p = jnp.zeros((Dp, Hp), jnp.bfloat16).at[:D, :H].set(
        w1.astype(jnp.bfloat16))
    b1_p = jnp.zeros((1, Hp), jnp.float32).at[:, :H].set(b1.astype(jnp.float32))
    w2r_p = jnp.zeros((1, Hp), jnp.float32).at[:, :H].set(
        w2.astype(jnp.float32).T)
    b2_p = b2.astype(jnp.float32).reshape(1, 1)
    return {"wproj": wproj_p, "w1": w1_p, "b1": b1_p, "w2r": w2r_p, "b2": b2_p}


# ------------------------------ kernel wrapper -------------------------------
def fused_forward(pooled, kp, *, row_tile=128):
    """pooled: [G, F] f32 -> logits [G, 1] f32 via one fused Pallas kernel."""
    G, F = pooled.shape
    Dp = kp["wproj"].shape[1]
    Hp = kp["w1"].shape[1]
    OUT_LANES = 128

    tm = min(row_tile, _round_up(max(G, 1), 8))   # sublane-aligned row tile
    G_pad = _round_up(G, tm)
    pooled_p = jnp.zeros((G_pad, F), jnp.bfloat16).at[:G].set(
        pooled.astype(jnp.bfloat16))

    out = pl.pallas_call(
        fused_predictor_kernel,
        out_shape=jax.ShapeDtypeStruct((G_pad, OUT_LANES), jnp.float32),
        grid_spec=pltpu.PrefetchScalarGridSpec(
            num_scalar_prefetch=0,
            grid=(G_pad // tm,),
            in_specs=[
                pl.BlockSpec((tm, F), lambda i: (i, 0)),     # pooled rows (pipelined)
                pl.BlockSpec((F, Dp), lambda i: (0, 0)),     # w_proj (resident)
                pl.BlockSpec((Dp, Hp), lambda i: (0, 0)),    # w1     (resident)
                pl.BlockSpec((1, Hp), lambda i: (0, 0)),     # b1     (resident)
                pl.BlockSpec((1, Hp), lambda i: (0, 0)),     # w2 row (resident)
                pl.BlockSpec(memory_space=pltpu.MemorySpace.SMEM),  # b2 scalar
            ],
            out_specs=pl.BlockSpec((tm, OUT_LANES), lambda i: (i, 0)),
        ),
        compiler_params=pltpu.CompilerParams(
            dimension_semantics=("parallel",),
            vmem_limit_bytes=32 * 1024 * 1024,
        ),
    )(pooled_p, kp["wproj"], kp["w1"], kp["b1"], kp["w2r"], kp["b2"])

    return out[:G, :1]


# ---------------------- combined_model stand-in (glue) ----------------------
def mean_pool_per_graph(x, batch, num_graphs):
    """Deterministic stand-in for combined_model: mean-pool node features per graph.
    TODO(synk): real combined_model (graph + sequence encoder) is unspecified.
    """
    F = x.shape[1]
    sums = jnp.zeros((num_graphs, F), jnp.float32).at[batch].add(
        x.astype(jnp.float32))
    counts = jnp.zeros((num_graphs, 1), jnp.float32).at[batch].add(1.0)
    return sums / jnp.maximum(counts, 1.0)


# ------------------------------- full model ---------------------------------
@functools.partial(jax.jit, static_argnames=("num_graphs",))
def full_model_forward(kernel_params, token_idx, x, edge_index, edge_attr,
                       batch, num_graphs):
    del token_idx, edge_index, edge_attr  # stand-in encoder ignores these
    pooled = mean_pool_per_graph(x, batch, num_graphs)
    return fused_forward(pooled, kernel_params)


# -------------------------------- reference ---------------------------------
def reference_forward(params, pooled):
    """Pure-JAX reference with the same bf16-in / f32-accumulate strategy."""
    feats = jnp.dot(pooled.astype(jnp.bfloat16),
                    params["w_proj"].astype(jnp.bfloat16),
                    preferred_element_type=jnp.float32)
    h = jnp.dot(feats.astype(jnp.bfloat16),
                params["w1"].astype(jnp.bfloat16),
                preferred_element_type=jnp.float32) + params["b1"]
    h = jnp.maximum(h, 0.0)
    return h @ params["w2"] + params["b2"]


if __name__ == "__main__":
    key = jax.random.PRNGKey(0)
    k_param, k_x, k_tok, k_edge, k_eattr = jax.random.split(key, 5)

    # Small synthetic shapes consistent with the forward signature.
    num_graphs = 4       # graphs in the batch
    num_nodes = 32       # total nodes across graphs
    node_feat = 16       # raw node feature dim
    num_edges = 64
    edge_feat = 4
    seq_len = 8
    dim = 32             # predictor input dim

    params = init_params(k_param, node_feat, dim)
    kernel_params = prepare_kernel_params(params)

    x = jax.random.normal(k_x, (num_nodes, node_feat), dtype=jnp.float32)
    token_idx = jax.random.randint(k_tok, (num_graphs, seq_len), 0, 100)
    edge_index = jax.random.randint(k_edge, (2, num_edges), 0, num_nodes)
    edge_attr = jax.random.normal(k_eattr, (num_edges, edge_feat), dtype=jnp.float32)
    # assign nodes to graphs evenly (sorted, like torch_geometric batch vector)
    batch = jnp.repeat(jnp.arange(num_graphs), num_nodes // num_graphs)

    out = full_model_forward(kernel_params, token_idx, x, edge_index, edge_attr,
                             batch, num_graphs)
    out = jax.block_until_ready(out)

    # Sanity: output is [num_graphs, 1] logits.
    assert out.shape == (num_graphs, 1)
    assert bool(jnp.all(jnp.isfinite(out)))

    # Cross-check the fused Pallas kernel against a pure-JAX reference.
    pooled = mean_pool_per_graph(x, batch, num_graphs)
    ref = reference_forward(params, pooled)
    assert jnp.allclose(out, ref, atol=1e-2, rtol=1e-2), (out, ref)

    print("KERNEL_OK")
</pallas_src>

<mosaic_0001>
module attributes {stable_mosaic.version = 11 : i64} {
  func.func @fused_predictor_kernel(%arg0: i32, %arg1: memref<8x16xbf16, #tpu.memory_space<vmem>>, %arg2: memref<16x128xbf16, #tpu.memory_space<vmem>>, %arg3: memref<128x128xbf16, #tpu.memory_space<vmem>>, %arg4: memref<1x128xf32, #tpu.memory_space<vmem>>, %arg5: memref<1x128xf32, #tpu.memory_space<vmem>>, %arg6: memref<1x1xf32, #tpu.memory_space<smem>>, %arg7: memref<8x128xf32, #tpu.memory_space<vmem>>) attributes {dimension_semantics = [#tpu.dimension_semantics<parallel>], iteration_bounds = array<i64: 1>, scalar_prefetch = 0 : i64, scratch_operands = 0 : i64, tpu.core_type = #tpu.core_type<tc>, window_params = [{transform_indices = @transform_0, window_bounds = array<i64: 8, 16>}, {pipeline_mode = #tpu.pipeline_mode<synchronous>, transform_indices = @transform_1, window_bounds = array<i64: 16, 128>}, {pipeline_mode = #tpu.pipeline_mode<synchronous>, transform_indices = @transform_2, window_bounds = array<i64: 128, 128>}, {pipeline_mode = #tpu.pipeline_mode<synchronous>, transform_indices = @transform_3, window_bounds = array<i64: 1, 128>}, {pipeline_mode = #tpu.pipeline_mode<synchronous>, transform_indices = @transform_4, window_bounds = array<i64: 1, 128>}, {transform_indices = @transform_5, window_bounds = array<i64: 1, 1>}, {transform_indices = @transform_6, window_bounds = array<i64: 8, 128>}]} {
    %c0 = arith.constant 0 : index
    %c0_0 = arith.constant 0 : index
    %0 = vector.load %arg1[%c0, %c0_0] : memref<8x16xbf16, #tpu.memory_space<vmem>>, vector<8x16xbf16>
    %c0_1 = arith.constant 0 : index
    %c0_2 = arith.constant 0 : index
    %1 = vector.load %arg2[%c0_1, %c0_2] : memref<16x128xbf16, #tpu.memory_space<vmem>>, vector<16x128xbf16>
    %cst = arith.constant dense<0.000000e+00> : vector<8x128xf32>
    %2 = tpu.matmul %0, %1, %cst {dimension_numbers = #tpu.dot_dimension_numbers<[1], [0], [0], [1], [0, 0, 1, 1], [], []>} : vector<8x16xbf16>, vector<16x128xbf16>, vector<8x128xf32> -> vector<8x128xf32>
    %3 = arith.truncf %2 : vector<8x128xf32> to vector<8x128xbf16>
    %c0_3 = arith.constant 0 : index
    %c0_4 = arith.constant 0 : index
    %4 = vector.load %arg3[%c0_3, %c0_4] : memref<128x128xbf16, #tpu.memory_space<vmem>>, vector<128x128xbf16>
    %cst_5 = arith.constant dense<0.000000e+00> : vector<8x128xf32>
    %5 = tpu.matmul %3, %4, %cst_5 {dimension_numbers = #tpu.dot_dimension_numbers<[1], [0], [0], [1], [0, 0, 1, 1], [], []>} : vector<8x128xbf16>, vector<128x128xbf16>, vector<8x128xf32> -> vector<8x128xf32>
    %c0_6 = arith.constant 0 : index
    %c0_7 = arith.constant 0 : index
    %6 = vector.load %arg4[%c0_6, %c0_7] : memref<1x128xf32, #tpu.memory_space<vmem>>, vector<1x128xf32>
    %7 = vector.broadcast %6 : vector<1x128xf32> to vector<8x128xf32>
    %8 = arith.addf %5, %7 : vector<8x128xf32>
    %cst_8 = arith.constant 0.000000e+00 : f32
    %9 = vector.broadcast %cst_8 : f32 to vector<8x128xf32>
    %10 = arith.maximumf %8, %9 : vector<8x128xf32>
    %c0_9 = arith.constant 0 : index
    %c0_10 = arith.constant 0 : index
    %11 = vector.load %arg5[%c0_9, %c0_10] : memref<1x128xf32, #tpu.memory_space<vmem>>, vector<1x128xf32>
    %12 = vector.broadcast %11 : vector<1x128xf32> to vector<8x128xf32>
    %13 = arith.mulf %10, %12 : vector<8x128xf32>
    %cst_11 = arith.constant dense<0.000000e+00> : vector<8xf32>
    %14 = vector.multi_reduction <add>, %13, %cst_11 [1] : vector<8x128xf32> to vector<8xf32>
    %15 = vector.shape_cast %14 : vector<8xf32> to vector<8x1xf32>
    %c0_12 = arith.constant 0 : index
    %c0_13 = arith.constant 0 : index
    %16 = memref.load %arg6[%c0_12, %c0_13] : memref<1x1xf32, #tpu.memory_space<smem>>
    %17 = vector.broadcast %16 : f32 to vector<8x1xf32>
    %18 = arith.addf %15, %17 : vector<8x1xf32>
    %19 = vector.shape_cast %18 : vector<8x1xf32> to vector<8x1xf32>
    %20 = vector.broadcast %19 : vector<8x1xf32> to vector<8x128xf32>
    %c0_14 = arith.constant 0 : index
    %c0_15 = arith.constant 0 : index
    %21 = vector.load %arg7[%c0_14, %c0_15] : memref<8x128xf32, #tpu.memory_space<vmem>>, vector<8x128xf32>
    tpu.vector_store %arg7[%c0_14, %c0_15], %20 {strides = array<i32>} : memref<8x128xf32, #tpu.memory_space<vmem>>, vector<8x128xf32>,
    return
  }
  func.func @transform_0(%arg0: i32) -> (i32, i32) {
    %c0_i32 = arith.constant 0 : i32
    %c0_i32_0 = arith.constant 0 : i32
    return %arg0, %c0_i32 : i32, i32
  }
  func.func @transform_1(%arg0: i32) -> (i32, i32) {
    %c0_i32 = arith.constant 0 : i32
    %c0_i32_0 = arith.constant 0 : i32
    %c0_i32_1 = arith.constant 0 : i32
    return %c0_i32, %c0_i32_0 : i32, i32
  }
  func.func @transform_2(%arg0: i32) -> (i32, i32) {
    %c0_i32 = arith.constant 0 : i32
    %c0_i32_0 = arith.constant 0 : i32
    %c0_i32_1 = arith.constant 0 : i32
    return %c0_i32, %c0_i32_0 : i32, i32
  }
  func.func @transform_3(%arg0: i32) -> (i32, i32) {
    %c0_i32 = arith.constant 0 : i32
    %c0_i32_0 = arith.constant 0 : i32
    %c0_i32_1 = arith.constant 0 : i32
    return %c0_i32, %c0_i32_0 : i32, i32
  }
  func.func @transform_4(%arg0: i32) -> (i32, i32) {
    %c0_i32 = arith.constant 0 : i32
    %c0_i32_0 = arith.constant 0 : i32
    %c0_i32_1 = arith.constant 0 : i32
    return %c0_i32, %c0_i32_0 : i32, i32
  }
  func.func @transform_5(%arg0: i32) -> (i32, i32) {
    %c0_i32 = arith.constant 0 : i32
    %c0_i32_0 = arith.constant 0 : i32
    %c0_i32_1 = arith.constant 0 : i32
    return %c0_i32, %c0_i32_0 : i32, i32
  }
  func.func @transform_6(%arg0: i32) -> (i32, i32) {
    %c0_i32 = arith.constant 0 : i32
    %c0_i32_0 = arith.constant 0 : i32
    return %arg0, %c0_i32 : i32, i32
  }
}

</mosaic_0001>

<llo_original>
// kernel: full_model_forward.1
$region0: #{full_model_forward.1}
  #allocation0 [shape = 'u32[]', space=smem, size = 0x4, offset = 0x4, fixed_abs, tag = 'smem constant byte address 0x4 - core index']
  #allocation1 [shape = 'u32[72,128]{1,0:T(1,128)}', space=vmem, size = 0x9000, scoped, tag = 'internal scratch']
  #allocation2 [shape = 'f32[1,1]{1,0:T(1,128)S(6)}', space=smem, size = 0x200, scoped, tag = 'scoped memory for full_model_forward.1']
  %s0 = inlined_call_operand.vmem [shape: bf16[8,16], index: 0, kind: input, shape index: {}]
  %s1 = inlined_call_operand.vmem [shape: bf16[16,128], index: 1, kind: input, shape index: {}]
  %s2 = inlined_call_operand.vmem [shape: bf16[128,128], index: 2, kind: input, shape index: {}]
  %s3 = inlined_call_operand.vmem [shape: f32[1,128], index: 3, kind: input, shape index: {}]
  %s4 = inlined_call_operand.vmem [shape: f32[1,128], index: 4, kind: input, shape index: {}]
  %s5 = inlined_call_operand.<no memory space> [shape: f32[1,1], index: 5, kind: input, shape index: {}]
  %s6 = inlined_call_operand.vmem [shape: f32[8,128], index: 6, kind: output, shape index: {}]
  %s7 = sld [smem:[#allocation0]]
  $region34: #{full_model_forward.1} parent=0
    _
  %s9 = ssub.s32 1, %s7
  %s10 = scalar_select 0, %s9, %s7
  %11 = sst [smem:[#allocation2]] %s5
  // Predicated region
  $region2: #{full_model_forward.1} parent=0 // pred_check
    _
  $region3: #{full_model_forward.1} parent=0 // pred_check_branch
    %13 = sbr.rel (0) target = $region5
  $region4: #{full_model_forward.1} parent=0 // pred_region
    _
  $region5: #{full_model_forward.1} parent=0 // pred_fallthru
    _
  // Predicated region
  $region6: #{full_model_forward.1} parent=0 // pred_check
    _
  $region7: #{full_model_forward.1} parent=0 // pred_check_branch
    %15 = sbr.rel (0) target = $region9
  $region8: #{full_model_forward.1} parent=0 // pred_region
    _
  $region9: #{full_model_forward.1} parent=0 // pred_fallthru
    _
  // Predicated region
  $region10: #{full_model_forward.1} parent=0 // pred_check
    _
  $region11: #{full_model_forward.1} parent=0 // pred_check_branch
    %17 = sbr.rel (0) target = $region13
  $region12: #{full_model_forward.1} parent=0 // pred_region
    _
  $region13: #{full_model_forward.1} parent=0 // pred_fallthru
    _
  // Predicated region
  $region14: #{full_model_forward.1} parent=0 // pred_check
    _
  $region15: #{full_model_forward.1} parent=0 // pred_check_branch
    %19 = sbr.rel (0) target = $region17
  $region16: #{full_model_forward.1} parent=0 // pred_region
    _
  $region17: #{full_model_forward.1} parent=0 // pred_fallthru
    _
  // Predicated region
  $region18: #{full_model_forward.1} parent=0 // pred_check
    _
  $region19: #{full_model_forward.1} parent=0 // pred_check_branch
    %21 = sbr.rel (0) target = $region21
  $region20: #{full_model_forward.1} parent=0 // pred_region
    _
  $region21: #{full_model_forward.1} parent=0 // pred_fallthru
    _
  // Predicated region
  $region22: #{full_model_forward.1} parent=0 // pred_check
    _
  $region23: #{full_model_forward.1} parent=0 // pred_check_branch
    %23 = sbr.rel (0) target = $region25
  $region24: #{full_model_forward.1} parent=0 // pred_region
    _
  $region25: #{full_model_forward.1} parent=0 // pred_fallthru
    _
  %v25 = vld [vmem:[%s0] sm:$0xf]
  %v26 = vld [vmem:[%s1] sm:$0xf]
  %v27 = vld [vmem:[%s1 + $0x4] sm:$0xf]
  %v30 = vunpack.c.l.b16 %v26
  %v31 = vunpack.c.l.b16 %v27
  %v32 = vpack.c.b16 %v31, %v30
  %vm34 = vcmask 130048
  %v36 = vsel %vm34, %v25, 0
  %38 = vmatpush.bf16.msra.mxu0 0
  %39 = vmatpush.bf16.msra.mxu0 0
  %40 = vmatpush.bf16.msra.mxu0 0
  %41 = vmatpush.bf16.msra.mxu0 0
  %42 = vmatpush.bf16.msra.mxu0 0
  %43 = vmatpush.bf16.msra.mxu0 0
  %44 = vmatpush.bf16.msra.mxu0 0
  %45 = vmatpush.bf16.msra.mxu0 %v32
  %46 = vmatmul.bf16.gmra.mxu0 %v36
  %v47 = vpop.f32.mrf.mxu0
  %v48 = vadd.f32 0.0, %v47
  %v49 = vpop.f32.mrf.mxu0
  %50 = vdwg.mxu0
  %v51 = vpack.c.bf16 %v48, %v48
  %v52 = vld [vmem:[%s2] sm:$0xf]
  %v53 = vld [vmem:[%s2 + $0x4] sm:$0xf]
  %v54 = vld [vmem:[%s2 + $0x8] sm:$0xf]
  %v55 = vld [vmem:[%s2 + $0xc] sm:$0xf]
  %v56 = vld [vmem:[%s2 + $0x10] sm:$0xf]
  %v57 = vld [vmem:[%s2 + $0x14] sm:$0xf]
  %v58 = vld [vmem:[%s2 + $0x18] sm:$0xf]
  %v59 = vld [vmem:[%s2 + $0x1c] sm:$0xf]
  %v60 = vld [vmem:[%s2 + $0x20] sm:$0xf]
  %v61 = vld [vmem:[%s2 + $0x24] sm:$0xf]
  %v62 = vld [vmem:[%s2 + $0x28] sm:$0xf]
  %v63 = vld [vmem:[%s2 + $0x2c] sm:$0xf]
  %v64 = vld [vmem:[%s2 + $0x30] sm:$0xf]
  %v65 = vld [vmem:[%s2 + $0x34] sm:$0xf]
  %v66 = vld [vmem:[%s2 + $0x38] sm:$0xf]
  %v67 = vld [vmem:[%s2 + $0x3c] sm:$0xf]
  %v68 = vld [vmem:[%s3] sm:$0x1]
  %v70 = vperm.slane %v68, 0
  %v88 = vunpack.c.l.b16 %v52
  %v89 = vunpack.c.l.b16 %v53
  %v90 = vunpack.c.l.b16 %v54
  %v91 = vunpack.c.l.b16 %v55
  %v92 = vunpack.c.l.b16 %v56
  %v93 = vunpack.c.l.b16 %v57
  %v94 = vunpack.c.l.b16 %v58
  %v95 = vunpack.c.l.b16 %v59
  %v96 = vunpack.c.l.b16 %v60
  %v97 = vunpack.c.l.b16 %v61
  %v98 = vunpack.c.l.b16 %v62
  %v99 = vunpack.c.l.b16 %v63
  %v100 = vunpack.c.l.b16 %v64
  %v101 = vunpack.c.l.b16 %v65
  %v102 = vunpack.c.l.b16 %v66
  %v103 = vunpack.c.l.b16 %v67
  %v104 = vpack.c.b16 %v89, %v88
  %v105 = vpack.c.b16 %v91, %v90
  %v106 = vpack.c.b16 %v93, %v92
  %v107 = vpack.c.b16 %v95, %v94
  %v108 = vpack.c.b16 %v97, %v96
  %v109 = vpack.c.b16 %v99, %v98
  %v110 = vpack.c.b16 %v101, %v100
  %v111 = vpack.c.b16 %v103, %v102
  %120 = vmatpush.bf16.msra.mxu0 %v111
  %121 = vmatpush.bf16.msra.mxu0 %v110
  %122 = vmatpush.bf16.msra.mxu0 %v109
  %123 = vmatpush.bf16.msra.mxu0 %v108
  %124 = vmatpush.bf16.msra.mxu0 %v107
  %125 = vmatpush.bf16.msra.mxu0 %v106
  %126 = vmatpush.bf16.msra.mxu0 %v105
  %127 = vmatpush.bf16.msra.mxu0 %v104
  %128 = vmatmul.bf16.gmra.mxu0 %v51
  %v129 = vpop.f32.mrf.mxu0
  %v130 = vadd.f32 %v70, %v129
  %v131 = vpop.f32.mrf.mxu0
  %132 = vdwg.mxu0
  %v133 = vmax.f32 %v130, 0.0
  %v134 = vld [vmem:[%s4] sm:$0x1]
  %v136 = vperm.slane %v134, 0
  %v138 = vmul.f32 %v133, %v136
  %139 = vadd.xlane.f32.xlu0 %v138
  %v140 = vpop.xlane.xlu0 %139
  %s141 = sld [smem:[#allocation2]]
  %v142 = vstv %s141
  %v143 = vadd.f32 %v140, %v142
  %144 = vst [vmem:[%s6] sm:$0xff] %v143
  // Predicated region
  $region26: #{full_model_forward.1} parent=0 // pred_check
    _
  $region27: #{full_model_forward.1} parent=0 // pred_check_branch
    %146 = sbr.rel (0) target = $region29
  $region28: #{full_model_forward.1} parent=0 // pred_region
    _
  $region29: #{full_model_forward.1} parent=0 // pred_fallthru
    _
  // Predicated region
  $region30: #{full_model_forward.1} parent=0 // pred_check
    _
  $region31: #{full_model_forward.1} parent=0 // pred_check_branch
    %148 = sbr.rel (0) target = $region33
  $region32: #{full_model_forward.1} parent=0 // pred_region
    _
  $region33: #{full_model_forward.1} parent=0 // pred_fallthru
    _

</llo_original>
